<compile_context>
chip_gen: v7x
topology: tpu7x:2x2x1
jax: 0.10.0
libtpu: 0.0.40
codegen_flags: <defaults>
</compile_context>

<pallas_src>
import functools
import math

import jax
import jax.numpy as jnp
from jax import lax
from jax.experimental import pallas as pl
from jax.experimental.pallas import tpu as pltpu


def _round_up(x, m):
    return (x + m - 1) // m * m


def _nbytes(shape, dtype):
    n = 1
    for s in shape:
        n *= int(s)
    return n * jnp.dtype(dtype).itemsize


def _vmem_limit(block_bytes):
    # conservative: every block double-buffered by the auto-pipeline, + margin
    need = 2 * sum(block_bytes) + (4 << 20)
    return int(min(max(need, 32 << 20), 64 << 20))


# --------------------------------------------------------------------------
# Row- and column-tiled linear kernel: y = x @ w + b, with w already laid out
# (Cin, Cout).  Grid is ('parallel','parallel') over (row tiles, col tiles).
# --------------------------------------------------------------------------
def _linear_kernel(x_ref, w_ref, b_ref, o_ref):
    o_ref[...] = (jnp.dot(x_ref[...], w_ref[...],
                          preferred_element_type=jnp.float32)
                  + b_ref[...]).astype(o_ref.dtype)


def pallas_linear(x, w, b=None, *, compute_dtype=jnp.float32,
                  max_row_tile=512, max_col_tile=512):
    R, Cin = x.shape
    Cout = w.shape[1]
    Rp = _round_up(R, 8)
    row_tile = Rp if Rp <= max_row_tile else max_row_tile
    Rp = _round_up(Rp, row_tile)
    Cp = _round_up(Cout, 128)
    col_tile = Cp if Cp <= max_col_tile else max_col_tile
    Cp = _round_up(Cp, col_tile)

    x_p = jnp.zeros((Rp, Cin), compute_dtype).at[:R].set(x.astype(compute_dtype))
    w_p = jnp.zeros((Cin, Cp), compute_dtype).at[:, :Cout].set(w.astype(compute_dtype))
    b_p = jnp.zeros((1, Cp), jnp.float32)
    if b is not None:
        b_p = b_p.at[0, :Cout].set(b.astype(jnp.float32).reshape(-1))

    blk = [_nbytes((row_tile, Cin), compute_dtype),
           _nbytes((Cin, col_tile), compute_dtype),
           _nbytes((1, col_tile), jnp.float32),
           _nbytes((row_tile, col_tile), jnp.float32)]

    y = pl.pallas_call(
        _linear_kernel,
        out_shape=jax.ShapeDtypeStruct((Rp, Cp), jnp.float32),
        grid=(Rp // row_tile, Cp // col_tile),
        in_specs=[pl.BlockSpec((row_tile, Cin), lambda i, j: (i, 0)),
                  pl.BlockSpec((Cin, col_tile), lambda i, j: (0, j)),
                  pl.BlockSpec((1, col_tile), lambda i, j: (0, j))],
        out_specs=pl.BlockSpec((row_tile, col_tile), lambda i, j: (i, j)),
        compiler_params=pltpu.CompilerParams(
            dimension_semantics=("parallel", "parallel"),
            vmem_limit_bytes=_vmem_limit(blk)),
    )(x_p, w_p, b_p)
    return y[:R, :Cout]


# --------------------------------------------------------------------------
# Recurrent decoder kernel.  Grid = (batch tiles ['parallel'], T ['arbitrary']).
# Hidden-state carry lives in the resident hout output block; per-step tensors
# (hoisted layer-0 gates, top-layer hidden output) are streamed one step at a
# time; weights / keys / kproj / mask are constant-index blocks.
# --------------------------------------------------------------------------
def _decoder_kernel(num_layers, H, cdt,
                    gix_ref, keys_ref, bias_ref, h0_ref,
                    wq_ref, kproj_ref, wv_ref, *rest):
    n_w = 3 + 4 * (num_layers - 1)
    w_refs = rest[:n_w]
    htop_ref = rest[n_w]       # (1, bt, H)   this step's top-layer hidden
    hout_ref = rest[n_w + 1]   # (L, bt, H)   hidden-state carry across steps

    t = pl.program_id(1)

    @pl.when(t == 0)
    def _():
        hout_ref[...] = h0_ref[...]

    # ---- additive attention (key projection hoisted; mask = additive bias) ----
    query = hout_ref[num_layers - 1]                               # (bt, H) f32
    q_proj = jnp.dot(query.astype(cdt), wq_ref[...],
                     preferred_element_type=jnp.float32)           # (bt, H)
    feat = jnp.tanh(q_proj[:, None, :] + kproj_ref[...])           # (bt, K, H)
    scores = jnp.sum(feat * wv_ref[...], axis=-1) + bias_ref[...]  # (bt, K)
    scores = scores - jnp.max(scores, axis=-1, keepdims=True)
    ew = jnp.exp(scores)
    inv = pl.reciprocal(jnp.sum(ew, axis=-1, keepdims=True), approx=True)
    attn_w = ew * inv
    context = jnp.sum(attn_w[:, :, None] * keys_ref[...], axis=1)  # (bt, F) f32

    gi_x = gix_ref[0]          # (bt, 3H)  hoisted layer-0  x @ Wih_x + bih

    # ---- multi-layer GRU step: gate-fused (in, 3H) matmuls, sliced r/z/n ----
    layer_in = None
    wi = 0
    for l in range(num_layers):
        h_prev = hout_ref[l]                                       # (bt, H)
        if l == 0:
            wih_c, whh, bhh = w_refs[wi], w_refs[wi + 1], w_refs[wi + 2]
            wi += 3
            gi = gi_x + jnp.dot(context.astype(cdt), wih_c[...],
                                preferred_element_type=jnp.float32)
        else:
            wih, whh, bih, bhh = (w_refs[wi], w_refs[wi + 1],
                                  w_refs[wi + 2], w_refs[wi + 3])
            wi += 4
            gi = jnp.dot(layer_in.astype(cdt), wih[...],
                         preferred_element_type=jnp.float32) + bih[...]
        gh = jnp.dot(h_prev.astype(cdt), whh[...],
                     preferred_element_type=jnp.float32) + bhh[...]
        r = jax.nn.sigmoid(gi[:, :H] + gh[:, :H])
        z = jax.nn.sigmoid(gi[:, H:2 * H] + gh[:, H:2 * H])
        n = jnp.tanh(gi[:, 2 * H:] + r * gh[:, 2 * H:])
        h_new = (1.0 - z) * n + z * h_prev
        hout_ref[l] = h_new
        layer_in = h_new

    htop_ref[0] = layer_in


def attention_decoder_forward(params, target_X, encoder_output, encoder_H,
                              valid_lens, H_prev=None, *, num_layers,
                              encoder_num_directions,
                              compute_dtype=jnp.float32, batch_tile=None):
    B, T = target_X.shape
    K, F = encoder_output.shape[1], encoder_output.shape[2]
    E = params['embedding'].shape[1]
    H = params['w_q'].shape[0]
    V = params['w_out'].shape[0]
    cdt = compute_dtype

    if H_prev is None:
        if encoder_num_directions == 2:
            enc_hidden = encoder_H.shape[-1]
            eH = encoder_H.reshape(num_layers, 2, B, enc_hidden)
            H0 = jnp.concatenate([eH[:, 0], eH[:, 1]], axis=-1)   # (L, B, H)
        else:
            H0 = encoder_H
    else:
        H0 = H_prev

    Bp = _round_up(B, 8)                       # sublane-pad the batch dim
    btile = Bp if batch_tile is None else batch_tile
    assert btile % 8 == 0 and Bp % btile == 0
    nb = Bp // btile

    # ---- host glue: embedding gather + hoisted time-invariant projections ----
    x_emb = jnp.take(params['embedding'], target_X, axis=0)          # (B, T, E)
    x_tm = jnp.transpose(x_emb, (1, 0, 2)).astype(jnp.float32)       # (T, B, E)

    wih0 = params['gru'][0][0]
    bih0 = params['gru'][0][2]
    # layer-0 x-part of the input gates: one (T*B, E) @ (E, 3H) matmul (+ bih0)
    gi_x0 = pallas_linear(x_tm.reshape(T * B, E), wih0[:, :E].T, bih0,
                          compute_dtype=cdt).reshape(T, B, 3 * H)
    gi_x0_p = jnp.zeros((T, Bp, 3 * H), jnp.float32).at[:, :B].set(gi_x0)

    # hoisted key projection: one (B*K, F) @ (F, H) matmul
    kproj = pallas_linear(encoder_output.astype(jnp.float32).reshape(B * K, F),
                          params['w_k'].T, compute_dtype=cdt).reshape(B, K, H)
    kproj_p = jnp.zeros((Bp, K, H), jnp.float32).at[:B].set(kproj)

    keys_p = jnp.zeros((Bp, K, F), jnp.float32).at[:B].set(
        encoder_output.astype(jnp.float32))
    H0_p = jnp.zeros((num_layers, Bp, H), jnp.float32).at[:, :B].set(
        H0.astype(jnp.float32))

    # additive masking bias: 0 for valid keys, -1e6 for padding positions
    valid = jnp.zeros((Bp,), jnp.int32).at[:B].set(valid_lens.astype(jnp.int32))
    bias = jnp.where(jnp.arange(K, dtype=jnp.int32)[None, :] >= valid[:, None],
                     jnp.float32(-1000000.0), jnp.float32(0.0))      # (Bp, K)

    inputs = [gi_x0_p, keys_p, bias, H0_p,
              params['w_q'].T.astype(cdt), kproj_p,
              params['w_v'].astype(jnp.float32)]
    in_specs = [
        pl.BlockSpec((1, btile, 3 * H), lambda b, t: (t, b, 0)),      # streamed
        pl.BlockSpec((btile, K, F), lambda b, t: (b, 0, 0)),
        pl.BlockSpec((btile, K), lambda b, t: (b, 0)),
        pl.BlockSpec((num_layers, btile, H), lambda b, t: (0, b, 0)),
        pl.BlockSpec((H, H), lambda b, t: (0, 0)),
        pl.BlockSpec((btile, K, H), lambda b, t: (b, 0, 0)),
        pl.BlockSpec((1, H), lambda b, t: (0, 0)),
    ]
    blk_bytes = [_nbytes((1, btile, 3 * H), jnp.float32),
                 _nbytes((btile, K, F), jnp.float32),
                 _nbytes((btile, K), jnp.float32),
                 _nbytes((num_layers, btile, H), jnp.float32),
                 _nbytes((H, H), cdt),
                 _nbytes((btile, K, H), jnp.float32),
                 _nbytes((1, H), jnp.float32)]

    # GRU weights: gate-fused, pre-transposed to (in, 3H); biases as (1, 3H)
    for l, (wih, whh, bih, bhh) in enumerate(params['gru']):
        whh_t = whh.T.astype(cdt)                         # (H, 3H)
        bhh_r = bhh.reshape(1, 3 * H).astype(jnp.float32)
        if l == 0:
            wih_c = wih[:, E:].T.astype(cdt)              # (F, 3H); x-part hoisted
            inputs += [wih_c, whh_t, bhh_r]
            in_specs += [pl.BlockSpec((F, 3 * H), lambda b, t: (0, 0)),
                         pl.BlockSpec((H, 3 * H), lambda b, t: (0, 0)),
                         pl.BlockSpec((1, 3 * H), lambda b, t: (0, 0))]
            blk_bytes += [_nbytes((F, 3 * H), cdt), _nbytes((H, 3 * H), cdt),
                          _nbytes((1, 3 * H), jnp.float32)]
        else:
            wih_t = wih.T.astype(cdt)                     # (H, 3H)
            bih_r = bih.reshape(1, 3 * H).astype(jnp.float32)
            inputs += [wih_t, whh_t, bih_r, bhh_r]
            in_specs += [pl.BlockSpec((H, 3 * H), lambda b, t: (0, 0)),
                         pl.BlockSpec((H, 3 * H), lambda b, t: (0, 0)),
                         pl.BlockSpec((1, 3 * H), lambda b, t: (0, 0)),
                         pl.BlockSpec((1, 3 * H), lambda b, t: (0, 0))]
            blk_bytes += [_nbytes((H, 3 * H), cdt), _nbytes((H, 3 * H), cdt),
                          _nbytes((1, 3 * H), jnp.float32),
                          _nbytes((1, 3 * H), jnp.float32)]

    out_shape = (jax.ShapeDtypeStruct((T, Bp, H), jnp.float32),
                 jax.ShapeDtypeStruct((num_layers, Bp, H), jnp.float32))
    out_specs = (pl.BlockSpec((1, btile, H), lambda b, t: (t, b, 0)),      # streamed
                 pl.BlockSpec((num_layers, btile, H), lambda b, t: (0, b, 0)))
    blk_bytes += [_nbytes((1, btile, H), jnp.float32),
                  _nbytes((num_layers, btile, H), jnp.float32)]

    kernel = functools.partial(_decoder_kernel, num_layers, H, cdt)
    h_top, H_out_p = pl.pallas_call(
        kernel,
        out_shape=out_shape,
        grid=(nb, T),
        in_specs=in_specs,
        out_specs=out_specs,
        compiler_params=pltpu.CompilerParams(
            dimension_semantics=("parallel", "arbitrary"),
            vmem_limit_bytes=_vmem_limit(blk_bytes)),
    )(*inputs)

    # ---- vocab projection on un-padded rows only: (T*B, H) @ (H, V) ----
    pred_flat = pallas_linear(h_top[:, :B].reshape(T * B, H),
                              params['w_out'].T, params['b_out'],
                              compute_dtype=cdt)
    prediction = jnp.transpose(pred_flat.reshape(T, B, V), (1, 0, 2))   # (B, T, V)
    H_out = H_out_p[:, :B, :]
    return prediction, H_out


# ---------------- pure-JAX reference (mirrors the PyTorch forward) ----------------
def reference_forward(params, target_X, encoder_output, encoder_H, valid_lens,
                      H_prev=None, *, num_layers, encoder_num_directions):
    B, T = target_X.shape
    K = encoder_output.shape[1]
    H = params['w_q'].shape[0]
    if H_prev is None:
        if encoder_num_directions == 2:
            enc_hidden = encoder_H.shape[-1]
            eH = encoder_H.reshape(num_layers, 2, B, enc_hidden)
            Hs = jnp.concatenate([eH[:, 0], eH[:, 1]], axis=-1)
        else:
            Hs = encoder_H
    else:
        Hs = H_prev
    X = params['embedding'][target_X]            # (B, T, E)
    keys = values = encoder_output
    outs = []
    for t in range(T):
        x = X[:, t, :]
        query = Hs[-1]
        q = query @ params['w_q'].T
        k = jnp.einsum('bkf,hf->bkh', keys, params['w_k'])
        s = jnp.tanh(q[:, None, :] + k) @ params['w_v'][0]       # (B, K)
        mask = jnp.arange(K)[None, :] >= valid_lens[:, None]
        s = jnp.where(mask, -1000000.0, s)
        w = jax.nn.softmax(s, axis=-1)
        ctx = jnp.einsum('bk,bkf->bf', w, values)
        inp = jnp.concatenate([x, ctx], axis=-1)
        new_H = []
        for l, (wih, whh, bih, bhh) in enumerate(params['gru']):
            h_prev = Hs[l]
            gi = inp @ wih.T + bih
            gh = h_prev @ whh.T + bhh
            r = jax.nn.sigmoid(gi[:, :H] + gh[:, :H])
            z = jax.nn.sigmoid(gi[:, H:2 * H] + gh[:, H:2 * H])
            n = jnp.tanh(gi[:, 2 * H:] + r * gh[:, 2 * H:])
            h_new = (1.0 - z) * n + z * h_prev
            new_H.append(h_new)
            inp = h_new
        Hs = jnp.stack(new_H, axis=0)
        outs.append(inp)
    outputs = jnp.stack(outs, axis=1)            # (B, T, H)
    prediction = outputs @ params['w_out'].T + params['b_out']
    return prediction, Hs


def init_params(key, vocab_size, E, enc_dirs, enc_hidden, dec_hidden, num_layers):
    F = enc_dirs * enc_hidden
    H = dec_hidden
    ks = list(jax.random.split(key, 6 + 4 * num_layers))

    def xavier(k, shape):
        fan_out, fan_in = shape
        std = math.sqrt(2.0 / (fan_in + fan_out))
        return std * jax.random.normal(k, shape, dtype=jnp.float32)

    params = {
        'embedding': xavier(ks[0], (vocab_size, E)),
        'w_q': xavier(ks[1], (H, H)),          # query dim == decoder hidden
        'w_k': xavier(ks[2], (H, F)),
        'w_v': xavier(ks[3], (1, H)),
        'w_out': 0.1 * jax.random.normal(ks[4], (vocab_size, H), dtype=jnp.float32),
        'b_out': 0.1 * jax.random.normal(ks[5], (vocab_size,), dtype=jnp.float32),
        'gru': [],
    }
    idx = 6
    for l in range(num_layers):
        in_size = E + F if l == 0 else H
        wih = xavier(ks[idx], (3 * H, in_size)); idx += 1
        whh = xavier(ks[idx], (3 * H, H)); idx += 1
        bih = 0.05 * jax.random.normal(ks[idx], (3 * H,), dtype=jnp.float32); idx += 1
        bhh = 0.05 * jax.random.normal(ks[idx], (3 * H,), dtype=jnp.float32); idx += 1
        params['gru'].append((wih, whh, bih, bhh))
    return params


if __name__ == "__main__":
    B, T, K = 2, 4, 6          # batch, decoder steps, encoder steps
    vocab, E = 24, 8           # vocab size, embedding dims
    num_layers = 2
    enc_dirs = 2
    enc_hidden = 16
    dec_hidden = enc_dirs * enc_hidden   # 32 (required by the module's asserts)

    key = jax.random.PRNGKey(0)
    kp, kx, ke, kh = jax.random.split(key, 4)
    params = init_params(kp, vocab, E, enc_dirs, enc_hidden, dec_hidden, num_layers)

    target_X = jax.random.randint(kx, (B, T), 0, vocab, dtype=jnp.int32)
    encoder_output = jax.random.normal(ke, (B, K, enc_dirs * enc_hidden), jnp.float32)
    encoder_H = jax.random.normal(kh, (num_layers * enc_dirs, B, enc_hidden), jnp.float32)
    valid_lens = jnp.array([4, 6], dtype=jnp.int32)

    pred_ref, H_ref = reference_forward(
        params, target_X, encoder_output, encoder_H, valid_lens, None,
        num_layers=num_layers, encoder_num_directions=enc_dirs)

    # f32 path (tight tolerance vs exact reference)
    prediction, H_out = attention_decoder_forward(
        params, target_X, encoder_output, encoder_H, valid_lens, None,
        num_layers=num_layers, encoder_num_directions=enc_dirs,
        compute_dtype=jnp.float32)
    jax.block_until_ready((prediction, H_out))

    assert prediction.shape == (B, T, vocab)
    assert H_out.shape == (num_layers, B, dec_hidden)
    assert jnp.allclose(prediction, pred_ref, atol=2e-3, rtol=2e-3), "prediction mismatch"
    assert jnp.allclose(H_out, H_ref, atol=2e-3, rtol=2e-3), "hidden-state mismatch"

    # bf16 matmul path (v6e/v7x recommendation): f32 accumulation & state math,
    # looser tolerance for the bf16 operand rounding.
    pred_bf16, H_bf16 = attention_decoder_forward(
        params, target_X, encoder_output, encoder_H, valid_lens, None,
        num_layers=num_layers, encoder_num_directions=enc_dirs,
        compute_dtype=jnp.bfloat16)
    jax.block_until_ready((pred_bf16, H_bf16))
    assert jnp.allclose(pred_bf16, pred_ref, atol=5e-2, rtol=5e-2), "bf16 prediction mismatch"
    assert jnp.allclose(H_bf16, H_ref, atol=5e-2, rtol=5e-2), "bf16 hidden-state mismatch"

    print("KERNEL_OK")
</pallas_src>

<mosaic_0001>
module attributes {stable_mosaic.version = 11 : i64} {
  func.func @_linear_kernel(%arg0: i32, %arg1: i32, %arg2: memref<8x8xf32, #tpu.memory_space<vmem>>, %arg3: memref<8x128xf32, #tpu.memory_space<vmem>>, %arg4: memref<1x128xf32, #tpu.memory_space<vmem>>, %arg5: memref<8x128xf32, #tpu.memory_space<vmem>>) attributes {dimension_semantics = [#tpu.dimension_semantics<parallel>, #tpu.dimension_semantics<parallel>], iteration_bounds = array<i64: 1, 1>, scalar_prefetch = 0 : i64, scratch_operands = 0 : i64, tpu.core_type = #tpu.core_type<tc>, window_params = [{transform_indices = @transform_0, window_bounds = array<i64: 8, 8>}, {transform_indices = @transform_1, window_bounds = array<i64: 8, 128>}, {transform_indices = @transform_2, window_bounds = array<i64: 1, 128>}, {transform_indices = @transform_3, window_bounds = array<i64: 8, 128>}]} {
    %c0 = arith.constant 0 : index
    %c0_0 = arith.constant 0 : index
    %0 = vector.load %arg2[%c0, %c0_0] : memref<8x8xf32, #tpu.memory_space<vmem>>, vector<8x8xf32>
    %c0_1 = arith.constant 0 : index
    %c0_2 = arith.constant 0 : index
    %1 = vector.load %arg3[%c0_1, %c0_2] : memref<8x128xf32, #tpu.memory_space<vmem>>, vector<8x128xf32>
    %cst = arith.constant dense<0.000000e+00> : vector<8x128xf32>
    %2 = tpu.matmul %0, %1, %cst {dimension_numbers = #tpu.dot_dimension_numbers<[1], [0], [0], [1], [0, 0, 1, 1], [], []>} : vector<8x8xf32>, vector<8x128xf32>, vector<8x128xf32> -> vector<8x128xf32>
    %c0_3 = arith.constant 0 : index
    %c0_4 = arith.constant 0 : index
    %3 = vector.load %arg4[%c0_3, %c0_4] : memref<1x128xf32, #tpu.memory_space<vmem>>, vector<1x128xf32>
    %4 = vector.broadcast %3 : vector<1x128xf32> to vector<8x128xf32>
    %5 = arith.addf %2, %4 : vector<8x128xf32>
    %c0_5 = arith.constant 0 : index
    %c0_6 = arith.constant 0 : index
    %6 = vector.load %arg5[%c0_5, %c0_6] : memref<8x128xf32, #tpu.memory_space<vmem>>, vector<8x128xf32>
    tpu.vector_store %arg5[%c0_5, %c0_6], %5 {strides = array<i32>} : memref<8x128xf32, #tpu.memory_space<vmem>>, vector<8x128xf32>,
    return
  }
  func.func @transform_0(%arg0: i32, %arg1: i32) -> (i32, i32) {
    %c0_i32 = arith.constant 0 : i32
    %c0_i32_0 = arith.constant 0 : i32
    return %arg0, %c0_i32 : i32, i32
  }
  func.func @transform_1(%arg0: i32, %arg1: i32) -> (i32, i32) {
    %c0_i32 = arith.constant 0 : i32
    %c0_i32_0 = arith.constant 0 : i32
    return %c0_i32, %arg1 : i32, i32
  }
  func.func @transform_2(%arg0: i32, %arg1: i32) -> (i32, i32) {
    %c0_i32 = arith.constant 0 : i32
    %c0_i32_0 = arith.constant 0 : i32
    return %c0_i32, %arg1 : i32, i32
  }
  func.func @transform_3(%arg0: i32, %arg1: i32) -> (i32, i32) {
    %c0_i32 = arith.constant 0 : i32
    return %arg0, %arg1 : i32, i32
  }
}

</mosaic_0001>

<llo_original>
// kernel: tpu_custom_call.1
$region0: #{tpu_custom_call.1}
  #allocation0 [shape = 'u32[]', space=smem, size = 0x4, offset = 0x4, fixed_abs, tag = 'smem constant byte address 0x4 - core index']
  #allocation1 [shape = 'u32[144,128]{1,0:T(1,128)}', space=vmem, size = 0x12000, scoped, tag = 'internal scratch']
  %s0 = inlined_call_operand.hbm [shape: f32[8,8], index: 0, kind: input, shape index: {}]
  %s1 = inlined_call_operand.hbm [shape: f32[8,128], index: 1, kind: input, shape index: {}]
  %s2 = inlined_call_operand.vmem [shape: f32[1,128], index: 2, kind: input, shape index: {}]
  %s3 = inlined_call_operand.hbm [shape: f32[8,128], index: 3, kind: output, shape index: {}]
  %s4 = sld [smem:[#allocation0]]
  $region30: #{tpu_custom_call.1} parent=0
    _
  %s6 = ssub.s32 1, %s4
  %s7 = scalar_select 0, %s6, %s4
  $region1: #{tpu_custom_call.1} parent=0
    #allocation2 [shape = 'u8[4096]{0}', space=vmem, size = 0x1000, scoped, tag = 'input window, operand 0, single buffered']
    #allocation3 [shape = 's32[1]{0}', space=sflag, size = 0x4, scoped, tag = 'scoped memory for tpu_custom_call.1']
    #allocation4 [shape = 's32[1]{0}', space=sflag, size = 0x4, scoped, tag = 'scoped memory for tpu_custom_call.1']
    #allocation5 [shape = 'u8[4096]{0}', space=vmem, size = 0x1000, scoped, tag = 'input window, operand 1, single buffered']
    #allocation6 [shape = 's32[1]{0}', space=sflag, size = 0x4, scoped, tag = 'scoped memory for tpu_custom_call.1']
    #allocation7 [shape = 'u8[4096]{0}', space=vmem, size = 0x1000, scoped, tag = 'output window, operand 0, single buffered']
    %8 = vsyncpa [#allocation3], 0
    %9 = vsyncpa [#allocation6], 0
    %10 = vsyncpa [#allocation4], 0
    // Predicated region
    $region2: #{tpu_custom_call.1} parent=1 // pred_check
      _
    $region3: #{tpu_custom_call.1} parent=1 // pred_check_branch
      %12 = sbr.rel (0) target = $region5
    $region4: #{tpu_custom_call.1} parent=1 // pred_region
      %s14 = ssub.s32 128, 128
      %15 = vsyncadd [#allocation3], %s14
      %s17 = sshll.u32 [#allocation2], 4
      %s18 = int_to_ptr.vmem [resolvable:$true] %s17
      %20 = dma.hbm_to_vmem [thread:$0]  %s0, 128, %s18, [#allocation3]
    $region5: #{tpu_custom_call.1} parent=1 // pred_fallthru
      _
    // Predicated region
    $region6: #{tpu_custom_call.1} parent=1 // pred_check
      _
    $region7: #{tpu_custom_call.1} parent=1 // pred_check_branch
      %22 = sbr.rel (0) target = $region9
    $region8: #{tpu_custom_call.1} parent=1 // pred_region
      %s24 = ssub.s32 128, 128
      %25 = vsyncadd [#allocation6], %s24
      %s27 = sshll.u32 [#allocation5], 4
      %s28 = int_to_ptr.vmem [resolvable:$true] %s27
      %30 = dma.hbm_to_vmem [thread:$0]  %s1, 128, %s28, [#allocation6]
    $region9: #{tpu_custom_call.1} parent=1 // pred_fallthru
      _
    // Predicated region
    $region10: #{tpu_custom_call.1} parent=1 // pred_check
      _
    $region11: #{tpu_custom_call.1} parent=1 // pred_check_branch
      %32 = sbr.rel (0) target = $region13
    $region12: #{tpu_custom_call.1} parent=1 // pred_region
      _
    $region13: #{tpu_custom_call.1} parent=1 // pred_fallthru
      _
    // Predicated region
    $region14: #{tpu_custom_call.1} parent=1 // pred_check
      _
    $region15: #{tpu_custom_call.1} parent=1 // pred_check_branch
      %34 = sbr.rel (0) target = $region17
    $region16: #{tpu_custom_call.1} parent=1 // pred_region
      %35 = dma.done [#allocation3], 128
    $region17: #{tpu_custom_call.1} parent=1 // pred_fallthru
      _
    // Predicated region
    $region18: #{tpu_custom_call.1} parent=1 // pred_check
      _
    $region19: #{tpu_custom_call.1} parent=1 // pred_check_branch
      %37 = sbr.rel (0) target = $region21
    $region20: #{tpu_custom_call.1} parent=1 // pred_region
      %38 = dma.done [#allocation6], 128
    $region21: #{tpu_custom_call.1} parent=1 // pred_fallthru
      _
    %v39 = vld [vmem:[#allocation2] sm:$0xff]
    %v40 = vld [vmem:[#allocation5] sm:$0xff]
    %v41 = vld [vmem:[%s2] sm:$0x1]
    %v43 = vlaneseq
    %v44 = vshrl.u32 %v43, 7
    %v45 = vsub.s32 0, %v44
    %v46 = vrot.slane %v41, %v45
    %vm48 = vcmask 64512
    %v50 = vsel %vm48, %v39, 0
    %52 = vmatprep.subr.mxu0 0.0
    %53 = vmatpush1.msra.mxu0 %v40
    %54 = vmatprep.subr.mxu0 0.0
    %55 = vmatpush1.msra.mxu0 0.0
    %56 = vmatprep.subr.mxu0 0.0
    %57 = vmatpush1.msra.mxu0 0.0
    %58 = vmatprep.subr.mxu0 0.0
    %59 = vmatpush1.msra.mxu0 0.0
    %60 = vmatprep.subr.mxu0 0.0
    %61 = vmatpush1.msra.mxu0 0.0
    %62 = vmatprep.subr.mxu0 0.0
    %63 = vmatpush1.msra.mxu0 0.0
    %64 = vmatprep.subr.mxu0 0.0
    %65 = vmatpush1.msra.mxu0 0.0
    %66 = vmatprep.subr.mxu0 0.0
    %67 = vmatpush1.msra.mxu0 0.0
    %68 = vmatprep.subr.mxu0 0.0
    %69 = vmatpush1.msra.mxu0 0.0
    %70 = vmatprep.subr.mxu0 0.0
    %71 = vmatpush1.msra.mxu0 0.0
    %72 = vmatprep.subr.mxu0 0.0
    %73 = vmatpush1.msra.mxu0 0.0
    %74 = vmatprep.subr.mxu0 0.0
    %75 = vmatpush1.msra.mxu0 0.0
    %76 = vmatprep.subr.mxu0 0.0
    %77 = vmatpush1.msra.mxu0 0.0
    %78 = vmatprep.subr.mxu0 0.0
    %79 = vmatpush1.msra.mxu0 0.0
    %80 = vmatprep.subr.mxu0 0.0
    %81 = vmatpush1.msra.mxu0 0.0
    %82 = vmatprep.subr.mxu0 0.0
    %83 = vmatpush1.msra.mxu0 0.0
    %84 = vmatprep.subr.mxu0 0.0
    %85 = vmatpush1.msra.mxu0 0.0
    %86 = vmatprep.subr.mxu0 0.0
    %87 = vmatpush1.msra.mxu0 0.0
    %88 = vmatprep.subr.mxu0 0.0
    %89 = vmatpush1.msra.mxu0 0.0
    %90 = vmatprep.subr.mxu0 0.0
    %91 = vmatpush1.msra.mxu0 0.0
    %92 = vmatprep.subr.mxu0 0.0
    %93 = vmatpush1.msra.mxu0 0.0
    %94 = vmatprep.subr.mxu0 0.0
    %95 = vmatpush1.msra.mxu0 0.0
    %96 = vmatprep.subr.mxu0 0.0
    %97 = vmatpush1.msra.mxu0 0.0
    %98 = vmatprep.subr.mxu0 0.0
    %99 = vmatpush1.msra.mxu0 0.0
    %100 = vmatprep.subr.mxu0 0.0
    %101 = vmatpush1.msra.mxu0 0.0
    %102 = vmatprep.subr.mxu0 0.0
    %103 = vmatpush1.msra.mxu0 0.0
    %104 = vmatprep.subr.mxu0 0.0
    %105 = vmatpush1.msra.mxu0 0.0
    %106 = vmatprep.subr.mxu0 0.0
    %107 = vmatpush1.msra.mxu0 0.0
    %108 = vmatprep.subr.mxu0 0.0
    %109 = vmatpush1.msra.mxu0 0.0
    %110 = vmatprep.subr.mxu0 0.0
    %111 = vmatpush1.msra.mxu0 0.0
    %112 = vmatprep.subr.mxu0 0.0
    %113 = vmatpush1.msra.mxu0 0.0
    %114 = vmatprep.subr.mxu0 0.0
    %115 = vmatpush1.msra.mxu0 0.0
    %116 = vmatprep.mubr.f32.mxu0 0.0
    %117 = vmatmul.mubr.f32.gmra.mrb[0].mxu0 %v50
    %v118 = vpop.f32.mrb[0].mxu0
    %v119 = vadd.f32 %v46, %v118
    %v120 = vpop.f32.mrb[0].mxu0
    %121 = vdwg.mxu0
    %122 = vst [vmem:[#allocation7] sm:$0xff] %v119
    // Predicated region
    $region22: #{tpu_custom_call.1} parent=1 // pred_check
      _
    $region23: #{tpu_custom_call.1} parent=1 // pred_check_branch
      %124 = sbr.rel (0) target = $region25
    $region24: #{tpu_custom_call.1} parent=1 // pred_region
      %s126 = ssub.s32 128, 128
      %127 = vsyncadd [#allocation4], %s126
      %s129 = sshll.u32 [#allocation7], 4
      %s130 = int_to_ptr.vmem [resolvable:$true] %s129
      %132 = dma.vmem_to_hbm [thread:$0]  %s130, 128, %s3, [#allocation4]
    $region25: #{tpu_custom_call.1} parent=1 // pred_fallthru
      _
    // Predicated region
    $region26: #{tpu_custom_call.1} parent=1 // pred_check
      _
    $region27: #{tpu_custom_call.1} parent=1 // pred_check_branch
      %134 = sbr.rel (0) target = $region29
    $region28: #{tpu_custom_call.1} parent=1 // pred_region
      %135 = dma.done [#allocation4], 128
    $region29: #{tpu_custom_call.1} parent=1 // pred_fallthru
      _
    %136 = vsyncpa [#allocation3], 1
    %137 = vsyncpa [#allocation6], 1
    %138 = vsyncpa [#allocation4], 1

</llo_original>
